<compile_context>
chip_gen: v7x
topology: tpu7x:2x2x1
jax: 0.10.0
libtpu: 0.0.40
codegen_flags: <defaults>
</compile_context>

<pallas_src>
import math
import functools

import jax
import jax.numpy as jnp
from jax.experimental import pallas as pl
from jax.experimental.pallas import tpu as pltpu


def _same_pad_amounts(in_h, in_w, kernel_size, stride):
    """Replicates Conv2dSamePad.forward padding math exactly (no clamping)."""
    kh, kw = kernel_size
    sh, sw = stride
    out_h = math.ceil(float(in_h) / float(sh))
    out_w = math.ceil(float(in_w) / float(sw))
    pad_along_h = (out_h - 1) * sh + kh - in_h
    pad_along_w = (out_w - 1) * sw + kw - in_w
    pad_top = math.floor(pad_along_h / 2)
    pad_left = math.floor(pad_along_w / 2)
    pad_bottom = pad_along_h - pad_top
    pad_right = pad_along_w - pad_left
    return pad_top, pad_bottom, pad_left, pad_right


# ---------------------------------------------------------------------------
# Kernels
# ---------------------------------------------------------------------------

def _same_pad_kernel(x_ref, o_ref, *, pad_top, pad_bottom, pad_left,
                     pad_right, in_h, in_w):
    """Generic path: pads one (tile_nc, in_h, in_w) block -> (tile_nc, out_h, out_w).

    The left/right zero columns are fused with x into one full-width band in
    registers so the middle rows are written with a single full-width store
    (no per-column masked strip stores, no lane-shifted interior store).
    """
    tile_nc, out_h, out_w = o_ref.shape
    dt = o_ref.dtype

    x = x_ref[...]
    if pad_left > 0 or pad_right > 0:
        parts = []
        if pad_left > 0:
            parts.append(jnp.zeros((tile_nc, in_h, pad_left), dt))
        parts.append(x)
        if pad_right > 0:
            parts.append(jnp.zeros((tile_nc, in_h, pad_right), dt))
        band = jnp.concatenate(parts, axis=2)
    else:
        band = x

    # One full-width store for all the middle rows.
    o_ref[:, pad_top:pad_top + in_h, :] = band

    # Top / bottom zero strips: full-width contiguous stores.
    if pad_top > 0:
        o_ref[:, :pad_top, :] = jnp.zeros((tile_nc, pad_top, out_w), dt)
    if pad_bottom > 0:
        o_ref[:, pad_top + in_h:, :] = jnp.zeros((tile_nc, pad_bottom, out_w), dt)


def _same_pad_h_only_kernel(x_ref, o_ref, *, top_elems, in_elems):
    """Lane-dense path (pad_left == pad_right == 0).

    Input is (tile_nc, h*w), output is (tile_nc, out_h*out_w): the padded
    tensor is {zeros | x | zeros} contiguous along the flattened H*W axis, so
    the interior is one big contiguous lane-dense store.
    """
    tile_nc, out_elems = o_ref.shape
    dt = o_ref.dtype

    o_ref[:, top_elems:top_elems + in_elems] = x_ref[...]
    if top_elems > 0:
        o_ref[:, :top_elems] = jnp.zeros((tile_nc, top_elems), dt)
    bottom_elems = out_elems - top_elems - in_elems
    if bottom_elems > 0:
        o_ref[:, top_elems + in_elems:] = jnp.zeros((tile_nc, bottom_elems), dt)


# ---------------------------------------------------------------------------
# Tiling heuristics (VMEM-aware, generation-aware)
# ---------------------------------------------------------------------------

def _round_up(v, m):
    return -(-v // m) * m


def _sublane_multiple(dtype):
    itemsize = jnp.dtype(dtype).itemsize
    if itemsize >= 4:
        return 8
    return 8 * (4 // itemsize)   # 16 for 2-byte, 32 for 1-byte


def _budgets():
    """(per-step block budget, vmem_limit_bytes, min grid steps) per chip gen."""
    vmem_cap = None
    try:
        info = pltpu.get_tpu_info()
        for name in ("vmem_capacity_bytes", "vmem_size_bytes", "vmem_bytes"):
            v = getattr(info, name, None)
            if v:
                vmem_cap = int(v)
                break
    except Exception:
        vmem_cap = None
    if vmem_cap is None:
        vmem_cap = 64 * 1024 * 1024   # be conservative: assume v7x-class VMEM
    if vmem_cap <= 64 * 1024 * 1024:
        # v7x: 64 MiB physical VMEM -> ~12 MiB in+out block per step
        # (<= 24 MiB double-buffered), 48 MiB scoped limit, and >= 4 grid
        # steps so each of the two TensorCores gets >= 2 pipelined steps.
        return 12 * 1024 * 1024, 48 * 1024 * 1024, 4
    # v5e / v6e: 128 MiB physical VMEM.
    return 24 * 1024 * 1024, 96 * 1024 * 1024, 2


def _choose_tile_nc(nc, per_slice_bytes, block_budget_bytes, min_steps,
                    lane_dense):
    """Largest tile whose true (vreg-rounded) in+out block fits the budget.

    No 'divides nc' restriction: the grid uses cdiv and Pallas handles the
    ragged last block (blocks span full H/W, so partial blocks are safe).
    """
    max_tile = max(1, block_budget_bytes // max(per_slice_bytes, 1))
    tile = min(nc, max_tile)
    if nc >= min_steps:
        # Keep >= min_steps grid steps so the BlockSpec pipeline has a steady
        # state (and both v7x TensorCores get work under "parallel").
        tile = min(tile, -(-nc // min_steps))
    if lane_dense and tile != nc:
        # 2-D blocks: the second-to-last block dim must be a multiple of 8
        # (f32 sublane) unless it spans the whole axis.
        tile = (tile // 8) * 8
        if tile == 0:
            tile = nc if nc <= max_tile else min(8, nc)
    return max(tile, 1)


# ---------------------------------------------------------------------------
# Wrapper (== Conv2dSamePad.forward)
# ---------------------------------------------------------------------------

def conv2d_same_pad(x, kernel_size, stride):
    """Pallas implementation of Conv2dSamePad.forward (NCHW in, NCHW out)."""
    if not isinstance(kernel_size, (list, tuple)):
        kernel_size = (kernel_size, kernel_size)
    if not isinstance(stride, (list, tuple)):
        stride = (stride, stride)

    n, c, h, w = x.shape
    pad_top, pad_bottom, pad_left, pad_right = _same_pad_amounts(
        h, w, kernel_size, stride)

    # F.pad semantics: negative pad amounts crop.  Handle cropping by slicing
    # in the wrapper, then run the kernel on the non-negative remainder.
    if min(pad_top, pad_bottom, pad_left, pad_right) < 0:
        h0, h1 = max(-pad_top, 0), h - max(-pad_bottom, 0)
        w0, w1 = max(-pad_left, 0), w - max(-pad_right, 0)
        x = x[:, :, h0:h1, w0:w1]
        n, c, h, w = x.shape
        pad_top, pad_bottom = max(pad_top, 0), max(pad_bottom, 0)
        pad_left, pad_right = max(pad_left, 0), max(pad_right, 0)

    if pad_top == 0 and pad_bottom == 0 and pad_left == 0 and pad_right == 0:
        # SAME padding is a no-op: skip the kernel launch and HBM round trip.
        return x

    out_h = h + pad_top + pad_bottom
    out_w = w + pad_left + pad_right
    nc = n * c
    itemsize = jnp.dtype(x.dtype).itemsize
    sub = _sublane_multiple(x.dtype)
    block_budget, vmem_limit, min_steps = _budgets()

    if pad_left == 0 and pad_right == 0:
        # Lane-dense path: only H padding -> flatten H,W so every store is a
        # wide contiguous lane-dense store and VMEM blocks have no lane waste.
        in_e, out_e = h * w, out_h * out_w
        per_slice = (_round_up(in_e, 128) + _round_up(out_e, 128)) * itemsize
        tile_nc = _choose_tile_nc(nc, per_slice, block_budget, min_steps,
                                  lane_dense=True)
        x_flat = x.reshape(nc, in_e)
        kernel = functools.partial(_same_pad_h_only_kernel,
                                   top_elems=pad_top * out_w, in_elems=in_e)
        out_flat = pl.pallas_call(
            kernel,
            out_shape=jax.ShapeDtypeStruct((nc, out_e), x.dtype),
            grid_spec=pltpu.PrefetchScalarGridSpec(
                num_scalar_prefetch=0,
                grid=(pl.cdiv(nc, tile_nc),),
                in_specs=[pl.BlockSpec((tile_nc, in_e), lambda i: (i, 0))],
                out_specs=pl.BlockSpec((tile_nc, out_e), lambda i: (i, 0)),
            ),
            compiler_params=pltpu.CompilerParams(
                dimension_semantics=("parallel",),
                vmem_limit_bytes=vmem_limit),
        )(x_flat)
        return out_flat.reshape(n, c, out_h, out_w)

    # Generic path (W padding present): keep H, W dims so the W pad can be
    # fused into a single full-width band store per block.
    # True vreg-tiled footprint per (n, c) slice: sublane- and lane-rounded.
    per_slice = (_round_up(h, sub) * _round_up(w, 128)
                 + _round_up(out_h, sub) * _round_up(out_w, 128)) * itemsize
    tile_nc = _choose_tile_nc(nc, per_slice, block_budget, min_steps,
                              lane_dense=False)
    x_flat = x.reshape(nc, h, w)
    kernel = functools.partial(
        _same_pad_kernel,
        pad_top=pad_top, pad_bottom=pad_bottom,
        pad_left=pad_left, pad_right=pad_right,
        in_h=h, in_w=w)

    out_flat = pl.pallas_call(
        kernel,
        out_shape=jax.ShapeDtypeStruct((nc, out_h, out_w), x.dtype),
        grid_spec=pltpu.PrefetchScalarGridSpec(
            num_scalar_prefetch=0,
            grid=(pl.cdiv(nc, tile_nc),),
            in_specs=[pl.BlockSpec((tile_nc, h, w), lambda i: (i, 0, 0))],
            out_specs=pl.BlockSpec((tile_nc, out_h, out_w),
                                   lambda i: (i, 0, 0)),
        ),
        compiler_params=pltpu.CompilerParams(
            dimension_semantics=("parallel",),
            vmem_limit_bytes=vmem_limit),
    )(x_flat)
    return out_flat.reshape(n, c, out_h, out_w)


if __name__ == "__main__":
    key = jax.random.PRNGKey(0)
    x = jax.random.normal(key, (2, 4, 16, 16), dtype=jnp.float32)

    # Case 1: Conv2dSamePad(kernel_size=3, stride=2) -> pads (t,b,l,r)=(0,1,0,1)
    # (exercises the generic W-pad path with the fused full-width band store).
    out = conv2d_same_pad(x, 3, 2)
    out = jax.block_until_ready(out)
    pt, pb, plft, pr = _same_pad_amounts(16, 16, (3, 3), (2, 2))
    ref = jnp.pad(x, ((0, 0), (0, 0), (pt, pb), (plft, pr)),
                  mode="constant", constant_values=0.0)
    assert out.shape == ref.shape, (out.shape, ref.shape)
    assert jnp.allclose(out, ref), "mismatch vs reference padding (case 1)"

    # Case 2: Conv2dSamePad(kernel_size=(3,1), stride=(2,1)) -> H-only padding
    # (exercises the lane-dense flattened path).
    out2 = conv2d_same_pad(x, (3, 1), (2, 1))
    out2 = jax.block_until_ready(out2)
    pt2, pb2, pl2, pr2 = _same_pad_amounts(16, 16, (3, 1), (2, 1))
    ref2 = jnp.pad(x, ((0, 0), (0, 0), (pt2, pb2), (pl2, pr2)),
                   mode="constant", constant_values=0.0)
    assert out2.shape == ref2.shape, (out2.shape, ref2.shape)
    assert jnp.allclose(out2, ref2), "mismatch vs reference padding (case 2)"

    print("KERNEL_OK")
</pallas_src>

<mosaic_0001>
module attributes {stable_mosaic.version = 11 : i64} {
  func.func @_same_pad_kernel(%arg0: i32, %arg1: memref<2x16x16xf32, #tpu.memory_space<vmem>>, %arg2: memref<2x17x17xf32, #tpu.memory_space<vmem>>) attributes {dimension_semantics = [#tpu.dimension_semantics<parallel>], iteration_bounds = array<i64: 4>, scalar_prefetch = 0 : i64, scratch_operands = 0 : i64, tpu.core_type = #tpu.core_type<tc>, window_params = [{transform_indices = @transform_0, window_bounds = array<i64: 2, 16, 16>}, {transform_indices = @transform_1, window_bounds = array<i64: 2, 17, 17>}]} {
    %c0 = arith.constant 0 : index
    %c0_0 = arith.constant 0 : index
    %c0_1 = arith.constant 0 : index
    %0 = vector.load %arg1[%c0, %c0_0, %c0_1] : memref<2x16x16xf32, #tpu.memory_space<vmem>>, vector<2x16x16xf32>
    %cst = arith.constant 0.000000e+00 : f32
    %1 = vector.broadcast %cst : f32 to vector<2x16x1xf32>
    %2 = tpu.concatenate %0, %1 in 2 : vector<2x16x16xf32>, vector<2x16x1xf32> -> vector<2x16x17xf32>
    %c0_2 = arith.constant 0 : index
    %c0_3 = arith.constant 0 : index
    %c0_4 = arith.constant 0 : index
    %3 = vector.load %arg2[%c0_2, %c0_3, %c0_4] : memref<2x17x17xf32, #tpu.memory_space<vmem>>, vector<2x16x17xf32>
    tpu.vector_store %arg2[%c0_2, %c0_3, %c0_4], %2 {strides = array<i32>} : memref<2x17x17xf32, #tpu.memory_space<vmem>>, vector<2x16x17xf32>,
    %cst_5 = arith.constant 0.000000e+00 : f32
    %4 = vector.broadcast %cst_5 : f32 to vector<2x1x17xf32>
    %c0_6 = arith.constant 0 : index
    %c16 = arith.constant 16 : index
    %c0_7 = arith.constant 0 : index
    %5 = vector.load %arg2[%c0_6, %c16, %c0_7] : memref<2x17x17xf32, #tpu.memory_space<vmem>>, vector<2x1x17xf32>
    tpu.vector_store %arg2[%c0_6, %c16, %c0_7], %4 {strides = array<i32>} : memref<2x17x17xf32, #tpu.memory_space<vmem>>, vector<2x1x17xf32>,
    return
  }
  func.func @transform_0(%arg0: i32) -> (i32, i32, i32) {
    %c0_i32 = arith.constant 0 : i32
    %c0_i32_0 = arith.constant 0 : i32
    %c0_i32_1 = arith.constant 0 : i32
    return %arg0, %c0_i32, %c0_i32_0 : i32, i32, i32
  }
  func.func @transform_1(%arg0: i32) -> (i32, i32, i32) {
    %c0_i32 = arith.constant 0 : i32
    %c0_i32_0 = arith.constant 0 : i32
    %c0_i32_1 = arith.constant 0 : i32
    return %arg0, %c0_i32, %c0_i32_0 : i32, i32, i32
  }
}

</mosaic_0001>

<llo_original>
// kernel: tpu_custom_call.1
$region0: #{tpu_custom_call.1}
  #allocation0 [shape = 'u32[]', space=smem, size = 0x4, offset = 0x4, fixed_abs, tag = 'smem constant byte address 0x4 - core index']
  #allocation1 [shape = 'u32[144,128]{1,0:T(1,128)}', space=vmem, size = 0x12000, scoped, tag = 'internal scratch']
  %s0 = inlined_call_operand.hbm [shape: f32[8,16,16], index: 0, kind: input, shape index: {}]
  %s1 = inlined_call_operand.vmem [shape: f32[8,17,17], index: 1, kind: output, shape index: {}]
  %s2 = sld [smem:[#allocation0]]
  $region41: #{tpu_custom_call.1} parent=0
    _
  %s4 = ssub.s32 1, %s2
  %s5 = scalar_select 0, %s4, %s2
  $region1: #{tpu_custom_call.1} parent=0
    #allocation2 [shape = 'u8[32768]{0}', space=vmem, size = 0x8000, scoped, tag = 'input window, operand 0']
    #allocation3 [shape = 's32[2]{0}', space=sflag, size = 0x8, scoped, tag = 'scoped memory for tpu_custom_call.1']
    %6 = vsyncpa [#allocation3], 0
    %s7 = scalar_lea.sflag [#allocation3], 1
    %8 = vsyncpa %s7, 0
    loop: start=0, step=1, limit=6
    $region2: #{tpu_custom_call.1} parent=1 // loop_pre_header
      _
    $region3: #{tpu_custom_call.1} parent=1 // loop_header
      %s10 = sphi 0, %s14
      %p11 = scmp.ge.s32.totalorder %s10, 6
      %s20 = sphi 0, %s22
      %s23 = sphi 0, %s20
      %s24 = sphi 0, %s23
      %s40 = sphi 0, %s24
      %s46 = sphi 0, %s48
      %s49 = sphi 0, %s46
      %s50 = sphi 0, %s49
      %s66 = sphi 0, %s50
    $region4: #{tpu_custom_call.1} parent=1 // loop_header_branch
      %13 = sbr.rel (%p11) target = $region8
    $region5: #{tpu_custom_call.1} parent=1 // loop_body
      %s15 = ssub.s32 %s10, 1
      %s16 = ssub.s32 %s10, 2
      %s17 = sadd.s32 %s10, 1
      %s18 = ssub.s32 %s10, %s17
      %p19 = scmp.eq.s32.totalorder %s18, 0
      %s21 = sadd.s32 %s20, 1
      %s22 = scalar_select %p19, %s20, %s21
      %p25 = pneg %p19
      %p26 = scmp.eq.s32.totalorder %s10, 3
      %p27 = por %p25, %p26
      %p28 = scmp.ne.s32.totalorder %s20, %s23
      %p29 = scmp.eq.s32.totalorder %s10, 0
      %p30 = por %p28, %p29
      %p31 = scmp.ne.s32.totalorder %s20, %s23
      %p32 = scmp.eq.s32.totalorder %s15, 3
      %p33 = por %p31, %p32
      %p34 = scmp.ne.s32.totalorder %s23, %s24
      %p35 = scmp.eq.s32.totalorder %s15, 0
      %p36 = por %p34, %p35
      %p37 = scmp.ne.s32.totalorder %s23, %s24
      %p38 = scmp.eq.s32.totalorder %s16, 3
      %p39 = por %p37, %p38
      %p41 = scmp.ne.s32.totalorder %s24, %s40
      %p42 = scmp.eq.s32.totalorder %s16, 0
      %p43 = por %p41, %p42
      %s44 = ssub.s32 %s10, %s17
      %p45 = scmp.eq.s32.totalorder %s44, 0
      %s47 = sadd.s32 %s46, 1
      %s48 = scalar_select %p45, %s46, %s47
      %p51 = pneg %p45
      %p52 = scmp.eq.s32.totalorder %s10, 3
      %p53 = por %p51, %p52
      %p54 = scmp.ne.s32.totalorder %s46, %s49
      %p55 = scmp.eq.s32.totalorder %s10, 0
      %p56 = por %p54, %p55
      %p57 = scmp.ne.s32.totalorder %s46, %s49
      %p58 = scmp.eq.s32.totalorder %s15, 3
      %p59 = por %p57, %p58
      %p60 = scmp.ne.s32.totalorder %s49, %s50
      %p61 = scmp.eq.s32.totalorder %s15, 0
      %p62 = por %p60, %p61
      %p63 = scmp.ne.s32.totalorder %s49, %s50
      %p64 = scmp.eq.s32.totalorder %s16, 3
      %p65 = por %p63, %p64
      %p67 = scmp.ne.s32.totalorder %s50, %s66
      %p68 = scmp.eq.s32.totalorder %s16, 0
      %p69 = por %p67, %p68
      %p70 = scmp.le.s32.totalorder 1, %s10
      %p71 = scmp.lt.s32.totalorder %s10, 5
      %p72 = pnand %p70, %p71
      %p73 = pneg %p72
      // Predicated region
      $region9: #{tpu_custom_call.1} parent=5 // pred_check
        _
      $region10: #{tpu_custom_call.1} parent=5 // pred_check_branch
        %75 = sbr.rel (%p72) target = $region12
      $region11: #{tpu_custom_call.1} parent=5 // pred_region
        %s76 = ssub.s32 %s10, 1
      $region12: #{tpu_custom_call.1} parent=5 // pred_fallthru
        _
      %p77 = scmp.lt.s32.totalorder %s10, 4
      // Predicated region
      $region13: #{tpu_custom_call.1} parent=5 // pred_check
        %p78 = pneg %p77
      $region14: #{tpu_custom_call.1} parent=5 // pred_check_branch
        %80 = sbr.rel (%p78) target = $region16
      $region15: #{tpu_custom_call.1} parent=5 // pred_region
        // Predicated region
        $region17: #{tpu_custom_call.1} parent=15 // pred_check
          %p81 = pneg %p30
        $region18: #{tpu_custom_call.1} parent=15 // pred_check_branch
          %83 = sbr.rel (%p81) target = $region20
        $region19: #{tpu_custom_call.1} parent=15 // pred_region
          %s84 = sand.u32 %s20, 1
          %s85 = scalar_lea.sflag [#allocation3], %s84
          %s86 = sand.u32 %s20, 1
          %s87 = smul.addr %s86, 32
          %s88 = scalar_lea.vmem [#allocation2], %s87
          %s89 = smul.u32 2, %s10
          %s91 = ssub.s32 512, 512
          %92 = vsyncadd %s85, %s91
          %s93 = smul.addr %s89, 2
          %s94 = smul.addr %s93, 128
          %s95 = scalar_lea.hbm %s0, %s94
          %s96 = sshll.u32 %s88, 4
          %s97 = int_to_ptr.vmem [resolvable:$true] %s96
          %102 = dma.hbm_to_vmem [thread:$0]  %s95, 512, %s97, %s85, 128, 128, 8
        $region20: #{tpu_custom_call.1} parent=15 // pred_fallthru
          _
      $region16: #{tpu_custom_call.1} parent=5 // pred_fallthru
        _
      %p103 = scmp.le.s32.totalorder 1, %s10
      %p104 = scmp.lt.s32.totalorder %s10, 5
      %p105 = pnand %p103, %p104
      %p106 = pneg %p105
      // Predicated region
      $region21: #{tpu_custom_call.1} parent=5 // pred_check
        _
      $region22: #{tpu_custom_call.1} parent=5 // pred_check_branch
        %108 = sbr.rel (%p105) target = $region24
      $region23: #{tpu_custom_call.1} parent=5 // pred_region
        %s109 = ssub.s32 %s10, 1
        %s110 = sand.u32 %s23, 1
        %s111 = scalar_lea.sflag [#allocation3], %s110
        %s112 = sand.u32 %s23, 1
        %s113 = smul.addr %s112, 32
        %s114 = scalar_lea.vmem [#allocation2], %s113
        // Predicated region
        $region25: #{tpu_custom_call.1} parent=23 // pred_check
          %p115 = pneg %p36
        $region26: #{tpu_custom_call.1} parent=23 // pred_check_branch
          %117 = sbr.rel (%p115) target = $region28
        $region27: #{tpu_custom_call.1} parent=23 // pred_region
          %118 = dma.done %s111, 512
        $region28: #{tpu_custom_call.1} parent=23 // pred_fallthru
          _
        %s119 = sand.u32 %s23, 1
        %s120 = scalar_lea.sflag [#allocation3], %s119
        %s121 = sand.u32 %s23, 1
        %s122 = smul.addr %s121, 32
        %s123 = scalar_lea.vmem [#allocation2], %s122
        %p124 = pneg %p36
        %p125 = pneg %p33
        %p126 = pneg %p62
        %p127 = pneg %p59
        %s128 = smul.u32 2, %s15
        %p129 = scmp.lt.s32.totalorder %s128, 7
        %s130 = scalar_select %p129, %s128, 7
        %s131 = smul.addr %s130, 3
        %s132 = smul.addr %s131, 8
        %s133 = scalar_lea.vmem %s1, %s132
        %s134 = smul.u32 2, %s15
        %s135 = smul.u32 2, %s15
        %p136 = scmp.lt.s32.totalorder %s135, 7
        %s137 = scalar_select %p136, %s135, 7
        %s138 = smul.addr %s137, 3
        %s139 = smul.addr %s138, 8
        %s140 = scalar_lea.vmem %s1, %s139
        %s141 = smul.u32 2, %s15
        %v142 = vld [vmem:[%s114] sm:$0xff]
        %v143 = vld [vmem:[%s114 + $0x8] sm:$0xff]
        %v144 = vld [vmem:[%s114 + $0x10] sm:$0xff]
        %v145 = vld [vmem:[%s114 + $0x18] sm:$0xff]
        %vm146 = vcmask 130048
        %v147 = vsel %vm146, %v142, 0.0
        %v148 = vsel %vm146, %v143, 0.0
        %v149 = vsel %vm146, %v144, 0.0
        %v150 = vsel %vm146, %v145, 0.0
        %vm151 = vcmask 138240
        %152 = vst.msk [vmem:[%s140] sm:$0xff] %vm151, %v147
        %153 = vst.msk [vmem:[%s140 + $0x8] sm:$0xff] %vm151, %v148
        %154 = vst.msk [vmem:[%s140 + $0x18] sm:$0xff] %vm151, %v149
        %155 = vst.msk [vmem:[%s140 + $0x20] sm:$0xff] %vm151, %v150
        %vm156 = vcmask 131072
        %157 = vst.msk [vmem:[%s140 + $0x10] sm:$0x1] %vm156, 0.0
        %158 = vst.msk [vmem:[%s140 + $0x28] sm:$0x1] %vm156, 0.0
        %s159 = smul.u32 2, %s15
        %p160 = scmp.lt.s32.totalorder %s159, 7
        %s161 = scalar_select %p160, %s159, 7
        %s162 = smul.addr %s161, 3
        %s163 = smul.addr %s162, 8
        %s164 = scalar_lea.vmem %s1, %s163
        // Predicated region
        $region29: #{tpu_custom_call.1} parent=23 // pred_check
          %p165 = pneg %p59
        $region30: #{tpu_custom_call.1} parent=23 // pred_check_branch
          %167 = sbr.rel (%p165) target = $region32
        $region31: #{tpu_custom_call.1} parent=23 // pred_region
          %s168 = smul.u32 2, %s15
        $region32: #{tpu_custom_call.1} parent=23 // pred_fallthru
          _
      $region24: #{tpu_custom_call.1} parent=5 // pred_fallthru
        _
      %p169 = scmp.le.s32.totalorder 2, %s10
      // Predicated region
      $region33: #{tpu_custom_call.1} parent=5 // pred_check
        %p170 = pneg %p169
      $region34: #{tpu_custom_call.1} parent=5 // pred_check_branch
        %172 = sbr.rel (%p170) target = $region36
      $region35: #{tpu_custom_call.1} parent=5 // pred_region
        %s173 = ssub.s32 %s10, 2
        // Predicated region
        $region37: #{tpu_custom_call.1} parent=35 // pred_check
          %p174 = pneg %p65
        $region38: #{tpu_custom_call.1} parent=35 // pred_check_branch
          %176 = sbr.rel (%p174) target = $region40
        $region39: #{tpu_custom_call.1} parent=35 // pred_region
          %s177 = smul.u32 2, %s16
          %p178 = scmp.lt.s32.totalorder %s177, 7
          %s179 = scalar_select %p178, %s177, 7
          %s180 = smul.addr %s179, 3
          %s181 = smul.addr %s180, 8
          %s182 = scalar_lea.vmem %s1, %s181
        $region40: #{tpu_custom_call.1} parent=35 // pred_fallthru
          _
      $region36: #{tpu_custom_call.1} parent=5 // pred_fallthru
        _
    $region6: #{tpu_custom_call.1} parent=1 // loop_footer
      %s14 = sadd.s32 1, %s10
    $region7: #{tpu_custom_call.1} parent=1 // loop_footer_branch
      %9 = sbr.rel target = $region3
    $region8: #{tpu_custom_call.1} parent=1 // loop_exit
      _
    %183 = vsyncpa [#allocation3], 1
    %s184 = scalar_lea.sflag [#allocation3], 1
    %185 = vsyncpa %s184, 1

</llo_original>
